<compile_context>
chip_gen: v7x
topology: tpu7x:2x2x1
jax: 0.10.0
libtpu: 0.0.40
codegen_flags: <defaults>
</compile_context>

<pallas_src>
import jax
import jax.numpy as jnp
from jax.experimental import pallas as pl
from jax.experimental.pallas import tpu as pltpu


def _round_up(a, m):
    return (a + m - 1) // m * m


def _point_conv_kernel(x_ref, w_ref, b_ref, o_ref):
    # x_ref: (TILE_M, K)   rows = flattened (batch, out-point) pairs, K = stride*Cin
    # w_ref: (K, Cp)       zero-padded weight, resident across the grid
    # b_ref: (1, Cp)       bias in float32, resident across the grid
    # o_ref: (TILE_M, Cp)
    acc = jnp.dot(x_ref[...], w_ref[...], preferred_element_type=jnp.float32)
    o_ref[...] = (acc + b_ref[...]).astype(o_ref.dtype)


def point_conv_layer(x, weight, bias, *, stride=2, compute_dtype=None):
    """Forward of PointConvLayer.

    x:      (B, N, Cin)     -- layout the PyTorch module receives before its permute
    weight: (Cout, Cin, 1)  -- Conv1d(kernel_size=1) weight
    bias:   (Cout,)
    returns (B, n_out, Cout) with n_out = (N - 1)//stride + 1, dtype = x.dtype.

    compute_dtype: dtype fed to the MXU for x and weight (pass jnp.bfloat16 to
    halve HBM traffic on v6e/v7x).  Accumulation and bias add stay in float32.
    """
    B, N, Cin = x.shape
    Cout = weight.shape[0]
    if compute_dtype is None:
        compute_dtype = x.dtype
    out_dtype = x.dtype

    n_out = (N - 1) // stride + 1
    K = stride * Cin
    M = B * n_out

    # Lane-dense output only when the padding is cheap (<= 2x store bytes).
    if Cout % 128 != 0 and Cout >= 64:
        cout_p = _round_up(Cout, 128)
    else:
        cout_p = Cout

    # ---- input / weight prep (one-time, cheap XLA ops) ----------------------
    n_pad = n_out * stride - N
    if n_pad:
        # Pad rows only ever land on stride-index >= 1, which hit zero weights.
        x = jnp.pad(x, ((0, 0), (0, n_pad), (0, 0)))
    # (B, n_out*stride, Cin) -> (B*n_out, stride*Cin): pure row-major bitcast.
    x2 = x.reshape(M, K).astype(compute_dtype)

    # Weight: squeeze k=1, pre-transpose to (Cin, Cout), embed into (K, cout_p)
    # with zeros for the stride-skipped channel groups (and the Cout lane pad).
    w2 = weight.reshape(Cout, Cin).T.astype(compute_dtype)            # (Cin, Cout)
    w_k = jnp.zeros((K, cout_p), compute_dtype).at[:Cin, :Cout].set(w2)
    b2 = jnp.zeros((1, cout_p), jnp.float32).at[0, :Cout].set(
        bias.astype(jnp.float32))

    # ---- tiling (VMEM-budgeted, valid on v5e/v6e/v7x) ------------------------
    x_bytes = jnp.dtype(compute_dtype).itemsize
    o_bytes = jnp.dtype(out_dtype).itemsize
    vmem_budget = 24 * 1024 * 1024

    def vmem_need(tm):
        return (2 * tm * K * x_bytes          # double-buffered x tiles
                + 2 * tm * cout_p * o_bytes   # double-buffered out tiles
                + K * cout_p * x_bytes        # resident weight
                + cout_p * 4)                 # resident bias

    # Biggest tile that fits the budget; tile == M (full dim, any size) or a
    # multiple of 8 (sublane-aligned) to satisfy the (8,128) block constraint.
    tile_m = M if M <= 1024 else 1024
    while tile_m > 8 and vmem_need(tile_m) > vmem_budget:
        tile_m = max(8, _round_up(tile_m // 2, 8))
    num_tiles = pl.cdiv(M, tile_m)

    out2 = pl.pallas_call(
        _point_conv_kernel,
        out_shape=jax.ShapeDtypeStruct((M, cout_p), out_dtype),
        grid=(num_tiles,),
        in_specs=[
            pl.BlockSpec((tile_m, K), lambda i: (i, 0)),
            pl.BlockSpec((K, cout_p), lambda i: (0, 0)),   # resident weight
            pl.BlockSpec((1, cout_p), lambda i: (0, 0)),   # resident bias
        ],
        out_specs=pl.BlockSpec((tile_m, cout_p), lambda i: (i, 0)),
        compiler_params=pltpu.CompilerParams(
            dimension_semantics=("parallel",),
            vmem_limit_bytes=32 * 1024 * 1024,
        ),
    )(x2, w_k, b2)

    out = out2.reshape(B, n_out, cout_p)
    if cout_p != Cout:
        out = out[:, :, :Cout]
    return out


def point_conv_ref(x, weight, bias, *, stride=2):
    # Pure-JAX reference of the PyTorch forward.
    w2d = weight.reshape(weight.shape[0], weight.shape[1])
    xs = x[:, ::stride, :]
    return jnp.einsum("bnc,oc->bno", xs, w2d) + bias[None, None, :]


if __name__ == "__main__":
    key = jax.random.PRNGKey(0)
    k_x, k_w, k_b = jax.random.split(key, 3)

    B, N, C_in, C_out, stride = 2, 16, 4, 8, 2

    x = jax.random.normal(k_x, (B, N, C_in), dtype=jnp.float32)
    # Conv1d(C_in, C_out, kernel_size=1) params: weight (C_out, C_in, 1), bias (C_out,)
    weight = jax.random.normal(k_w, (C_out, C_in, 1), dtype=jnp.float32) * 0.1
    bias = jax.random.normal(k_b, (C_out,), dtype=jnp.float32) * 0.1

    n_out = (N - 1) // stride + 1
    ref = point_conv_ref(x, weight, bias, stride=stride)

    # f32 path. TPU default matmul precision uses bf16-mantissa passes for f32
    # inputs (in both the kernel and the einsum reference), so compare with a
    # tolerance that covers that, not bit-exactness.
    out = jax.block_until_ready(point_conv_layer(x, weight, bias, stride=stride))
    assert out.shape == (B, n_out, C_out), out.shape
    assert out.dtype == x.dtype, out.dtype
    assert jnp.allclose(out, ref, atol=2e-2, rtol=2e-2), "f32 mismatch vs reference"

    # bf16 compute path (halves HBM traffic on v6e/v7x; accumulation stays f32).
    out_bf16 = jax.block_until_ready(
        point_conv_layer(x, weight, bias, stride=stride,
                         compute_dtype=jnp.bfloat16))
    assert out_bf16.shape == (B, n_out, C_out), out_bf16.shape
    assert jnp.allclose(out_bf16, ref, atol=5e-2, rtol=5e-2), "bf16 mismatch"

    # Odd N exercises the stride-padding path (last point still kept, pad rows
    # only touch zero weights).
    x_odd = x[:, : N - 1, :]
    out_odd = jax.block_until_ready(
        point_conv_layer(x_odd, weight, bias, stride=stride))
    ref_odd = point_conv_ref(x_odd, weight, bias, stride=stride)
    assert out_odd.shape == ref_odd.shape, out_odd.shape
    assert jnp.allclose(out_odd, ref_odd, atol=2e-2, rtol=2e-2), "odd-N mismatch"

    print("KERNEL_OK")
</pallas_src>

<mosaic_0001>
module attributes {stable_mosaic.version = 11 : i64} {
  func.func @_point_conv_kernel(%arg0: i32, %arg1: memref<16x8xf32, #tpu.memory_space<vmem>>, %arg2: memref<8x8xf32, #tpu.memory_space<vmem>>, %arg3: memref<1x8xf32, #tpu.memory_space<vmem>>, %arg4: memref<16x8xf32, #tpu.memory_space<vmem>>) attributes {dimension_semantics = [#tpu.dimension_semantics<parallel>], iteration_bounds = array<i64: 1>, scalar_prefetch = 0 : i64, scratch_operands = 0 : i64, tpu.core_type = #tpu.core_type<tc>, window_params = [{transform_indices = @transform_0, window_bounds = array<i64: 16, 8>}, {pipeline_mode = #tpu.pipeline_mode<synchronous>, transform_indices = @transform_1, window_bounds = array<i64: 8, 8>}, {pipeline_mode = #tpu.pipeline_mode<synchronous>, transform_indices = @transform_2, window_bounds = array<i64: 1, 8>}, {transform_indices = @transform_3, window_bounds = array<i64: 16, 8>}]} {
    %c0 = arith.constant 0 : index
    %c0_0 = arith.constant 0 : index
    %0 = vector.load %arg1[%c0, %c0_0] : memref<16x8xf32, #tpu.memory_space<vmem>>, vector<16x8xf32>
    %c0_1 = arith.constant 0 : index
    %c0_2 = arith.constant 0 : index
    %1 = vector.load %arg2[%c0_1, %c0_2] : memref<8x8xf32, #tpu.memory_space<vmem>>, vector<8x8xf32>
    %cst = arith.constant dense<0.000000e+00> : vector<16x8xf32>
    %2 = tpu.matmul %0, %1, %cst {dimension_numbers = #tpu.dot_dimension_numbers<[1], [0], [0], [1], [0, 0, 1, 1], [], []>} : vector<16x8xf32>, vector<8x8xf32>, vector<16x8xf32> -> vector<16x8xf32>
    %c0_3 = arith.constant 0 : index
    %c0_4 = arith.constant 0 : index
    %3 = vector.load %arg3[%c0_3, %c0_4] : memref<1x8xf32, #tpu.memory_space<vmem>>, vector<1x8xf32>
    %4 = vector.broadcast %3 : vector<1x8xf32> to vector<16x8xf32>
    %5 = arith.addf %2, %4 : vector<16x8xf32>
    %c0_5 = arith.constant 0 : index
    %c0_6 = arith.constant 0 : index
    %6 = vector.load %arg4[%c0_5, %c0_6] : memref<16x8xf32, #tpu.memory_space<vmem>>, vector<16x8xf32>
    tpu.vector_store %arg4[%c0_5, %c0_6], %5 {strides = array<i32>} : memref<16x8xf32, #tpu.memory_space<vmem>>, vector<16x8xf32>,
    return
  }
  func.func @transform_0(%arg0: i32) -> (i32, i32) {
    %c0_i32 = arith.constant 0 : i32
    %c0_i32_0 = arith.constant 0 : i32
    return %arg0, %c0_i32 : i32, i32
  }
  func.func @transform_1(%arg0: i32) -> (i32, i32) {
    %c0_i32 = arith.constant 0 : i32
    %c0_i32_0 = arith.constant 0 : i32
    %c0_i32_1 = arith.constant 0 : i32
    return %c0_i32, %c0_i32_0 : i32, i32
  }
  func.func @transform_2(%arg0: i32) -> (i32, i32) {
    %c0_i32 = arith.constant 0 : i32
    %c0_i32_0 = arith.constant 0 : i32
    %c0_i32_1 = arith.constant 0 : i32
    return %c0_i32, %c0_i32_0 : i32, i32
  }
  func.func @transform_3(%arg0: i32) -> (i32, i32) {
    %c0_i32 = arith.constant 0 : i32
    %c0_i32_0 = arith.constant 0 : i32
    return %arg0, %c0_i32 : i32, i32
  }
}

</mosaic_0001>

<llo_original>
// kernel: tpu_custom_call.1
$region0: #{tpu_custom_call.1}
  #allocation0 [shape = 'u32[]', space=smem, size = 0x4, offset = 0x4, fixed_abs, tag = 'smem constant byte address 0x4 - core index']
  #allocation1 [shape = 'u32[144,128]{1,0:T(1,128)}', space=vmem, size = 0x12000, scoped, tag = 'internal scratch']
  %s0 = inlined_call_operand.vmem [shape: f32[16,8], index: 0, kind: input, shape index: {}]
  %s1 = inlined_call_operand.vmem [shape: f32[8,8], index: 1, kind: input, shape index: {}]
  %s2 = inlined_call_operand.vmem [shape: f32[1,8], index: 2, kind: input, shape index: {}]
  %s3 = inlined_call_operand.vmem [shape: f32[16,8], index: 3, kind: output, shape index: {}]
  %s4 = sld [smem:[#allocation0]]
  $region22: #{tpu_custom_call.1} parent=0
    _
  %s6 = ssub.s32 1, %s4
  %s7 = scalar_select 0, %s6, %s4
  // Predicated region
  $region2: #{tpu_custom_call.1} parent=0 // pred_check
    _
  $region3: #{tpu_custom_call.1} parent=0 // pred_check_branch
    %9 = sbr.rel (0) target = $region5
  $region4: #{tpu_custom_call.1} parent=0 // pred_region
    _
  $region5: #{tpu_custom_call.1} parent=0 // pred_fallthru
    _
  // Predicated region
  $region6: #{tpu_custom_call.1} parent=0 // pred_check
    _
  $region7: #{tpu_custom_call.1} parent=0 // pred_check_branch
    %11 = sbr.rel (0) target = $region9
  $region8: #{tpu_custom_call.1} parent=0 // pred_region
    _
  $region9: #{tpu_custom_call.1} parent=0 // pred_fallthru
    _
  // Predicated region
  $region10: #{tpu_custom_call.1} parent=0 // pred_check
    _
  $region11: #{tpu_custom_call.1} parent=0 // pred_check_branch
    %13 = sbr.rel (0) target = $region13
  $region12: #{tpu_custom_call.1} parent=0 // pred_region
    _
  $region13: #{tpu_custom_call.1} parent=0 // pred_fallthru
    _
  %v14 = vld [vmem:[%s0] sm:$0xff]
  %v15 = vld [vmem:[%s0 + $0x8] sm:$0xff]
  %v16 = vld [vmem:[%s1] sm:$0xff]
  %v17 = vld [vmem:[%s2] sm:$0x1]
  %v19 = vlaneseq
  %v20 = vshrl.u32 %v19, 7
  %v21 = vsub.s32 0, %v20
  %v22 = vrot.slane %v17, %v21
  %vm24 = vcmask 64512
  %v26 = vsel %vm24, %v14, 0
  %v29 = vsel %vm24, %v15, 0
  %31 = vmatprep.subr.mxu0 0.0
  %32 = vmatpush1.msra.mxu0 %v16
  %33 = vmatprep.subr.mxu0 0.0
  %34 = vmatpush1.msra.mxu0 0.0
  %35 = vmatprep.subr.mxu0 0.0
  %36 = vmatpush1.msra.mxu0 0.0
  %37 = vmatprep.subr.mxu0 0.0
  %38 = vmatpush1.msra.mxu0 0.0
  %39 = vmatprep.subr.mxu0 0.0
  %40 = vmatpush1.msra.mxu0 0.0
  %41 = vmatprep.subr.mxu0 0.0
  %42 = vmatpush1.msra.mxu0 0.0
  %43 = vmatprep.subr.mxu0 0.0
  %44 = vmatpush1.msra.mxu0 0.0
  %45 = vmatprep.subr.mxu0 0.0
  %46 = vmatpush1.msra.mxu0 0.0
  %47 = vmatprep.subr.mxu0 0.0
  %48 = vmatpush1.msra.mxu0 0.0
  %49 = vmatprep.subr.mxu0 0.0
  %50 = vmatpush1.msra.mxu0 0.0
  %51 = vmatprep.subr.mxu0 0.0
  %52 = vmatpush1.msra.mxu0 0.0
  %53 = vmatprep.subr.mxu0 0.0
  %54 = vmatpush1.msra.mxu0 0.0
  %55 = vmatprep.subr.mxu0 0.0
  %56 = vmatpush1.msra.mxu0 0.0
  %57 = vmatprep.subr.mxu0 0.0
  %58 = vmatpush1.msra.mxu0 0.0
  %59 = vmatprep.subr.mxu0 0.0
  %60 = vmatpush1.msra.mxu0 0.0
  %61 = vmatprep.subr.mxu0 0.0
  %62 = vmatpush1.msra.mxu0 0.0
  %63 = vmatprep.subr.mxu0 0.0
  %64 = vmatpush1.msra.mxu0 0.0
  %65 = vmatprep.subr.mxu0 0.0
  %66 = vmatpush1.msra.mxu0 0.0
  %67 = vmatprep.subr.mxu0 0.0
  %68 = vmatpush1.msra.mxu0 0.0
  %69 = vmatprep.subr.mxu0 0.0
  %70 = vmatpush1.msra.mxu0 0.0
  %71 = vmatprep.subr.mxu0 0.0
  %72 = vmatpush1.msra.mxu0 0.0
  %73 = vmatprep.subr.mxu0 0.0
  %74 = vmatpush1.msra.mxu0 0.0
  %75 = vmatprep.subr.mxu0 0.0
  %76 = vmatpush1.msra.mxu0 0.0
  %77 = vmatprep.subr.mxu0 0.0
  %78 = vmatpush1.msra.mxu0 0.0
  %79 = vmatprep.subr.mxu0 0.0
  %80 = vmatpush1.msra.mxu0 0.0
  %81 = vmatprep.subr.mxu0 0.0
  %82 = vmatpush1.msra.mxu0 0.0
  %83 = vmatprep.subr.mxu0 0.0
  %84 = vmatpush1.msra.mxu0 0.0
  %85 = vmatprep.subr.mxu0 0.0
  %86 = vmatpush1.msra.mxu0 0.0
  %87 = vmatprep.subr.mxu0 0.0
  %88 = vmatpush1.msra.mxu0 0.0
  %89 = vmatprep.subr.mxu0 0.0
  %90 = vmatpush1.msra.mxu0 0.0
  %91 = vmatprep.subr.mxu0 0.0
  %92 = vmatpush1.msra.mxu0 0.0
  %93 = vmatprep.subr.mxu0 0.0
  %94 = vmatpush1.msra.mxu0 0.0
  %95 = vmatprep.mubr.f32.mxu0 0.0
  %96 = vmatmul.mubr.f32.gmra.mrb[0].mxu0 %v26
  %v97 = vpop.f32.mrb[0].mxu0
  %v98 = vadd.f32 %v22, %v97
  %v99 = vpop.f32.mrb[0].mxu0
  %100 = vmatprep.mubr.f32.mxu0 0.0
  %101 = vmatmul.mubr.f32.gmra.mrb[0].mxu0 %v29
  %v102 = vpop.f32.mrb[0].mxu0
  %v103 = vadd.f32 %v22, %v102
  %v104 = vpop.f32.mrb[0].mxu0
  %105 = vdwg.mxu0
  %106 = vst.msk [vmem:[%s3] sm:$0xff] %vm24, %v98
  %107 = vst.msk [vmem:[%s3 + $0x8] sm:$0xff] %vm24, %v103
  // Predicated region
  $region14: #{tpu_custom_call.1} parent=0 // pred_check
    _
  $region15: #{tpu_custom_call.1} parent=0 // pred_check_branch
    %109 = sbr.rel (0) target = $region17
  $region16: #{tpu_custom_call.1} parent=0 // pred_region
    _
  $region17: #{tpu_custom_call.1} parent=0 // pred_fallthru
    _
  // Predicated region
  $region18: #{tpu_custom_call.1} parent=0 // pred_check
    _
  $region19: #{tpu_custom_call.1} parent=0 // pred_check_branch
    %111 = sbr.rel (0) target = $region21
  $region20: #{tpu_custom_call.1} parent=0 // pred_region
    _
  $region21: #{tpu_custom_call.1} parent=0 // pred_fallthru
    _

</llo_original>
